<compile_context>
chip_gen: v5e
topology: v5e:2x2
jax: 0.10.0
libtpu: 0.0.40
codegen_flags: <defaults>
</compile_context>

<pallas_src>
import jax
import jax.numpy as jnp
from jax.experimental import pallas as pl
from jax.experimental.pallas import tpu as pltpu


def _round_up(n: int, m: int) -> int:
    return (n + m - 1) // m * m


def _vmem_capacity_bytes() -> int:
    try:
        return int(pltpu.get_tpu_info().vmem_capacity_bytes)
    except Exception:
        return 64 * 1024 * 1024  # conservative fallback (v7x per-TC VMEM)


def _choose_tiles(rows, hp, *, w_itemsize, x_itemsize, out_itemsize, budget,
                  single_buffer_resident=True):
    """Pick (TM, TN).  TN == hp means fully VMEM-resident weight (length-1 N axis)."""
    rows_cap = _round_up(max(rows, 1), 8)

    def _shape_tm(tm):
        tm = max(8, (int(tm) // 8) * 8)          # sublane multiple
        if tm >= 128:
            tm = (tm // 128) * 128               # prefer full-vreg row multiples
        # Megacore (v7x): prefer >= 2 balanced row tiles when there is enough work.
        if rows >= 256 and pl.cdiv(rows, tm) < 2:
            tm = min(tm, _round_up(pl.cdiv(rows, 2), 128))
        return tm

    # --- Path A: weight fully resident in VMEM (TN = hp). ---
    n_wbuf = 1 if single_buffer_resident else 2
    fixed = n_wbuf * hp * hp * w_itemsize + n_wbuf * hp * 4          # W.T + bias
    per_row = 2 * hp * x_itemsize + 2 * hp * out_itemsize            # dbl-buffered x/out
    avail = budget - fixed
    if avail >= 8 * per_row:
        tm_cap = 1024 if hp <= 2048 else 512
        return _shape_tm(min(tm_cap, avail // per_row, rows_cap)), hp

    # --- Path B: stream (hp, TN) weight panels over an output-column grid axis. ---
    for tn in (512, 256, 128):
        if hp % tn:
            continue
        fixed_n = 2 * hp * tn * w_itemsize + 2 * tn * 4
        per_row_n = 2 * hp * x_itemsize + 2 * tn * out_itemsize
        avail_n = budget - fixed_n
        if avail_n < 8 * per_row_n:
            continue
        return _shape_tm(min(512, avail_n // per_row_n, rows_cap)), tn

    raise ValueError(
        f"padded hidden={hp} does not fit the VMEM budget ({budget} bytes) even with "
        f"128-column weight panels")


def _residual_linear_kernel(x_ref, wt_ref, b_ref, o_ref):
    # x_ref : (TM, Hp)  f32      streamed slab, resident across the N axis
    # wt_ref: (Hp, TN)  compute  pre-transposed weight panel (already W.T)
    # b_ref : (1, TN)   f32
    # o_ref : (TM, TN)  out dtype
    tn = o_ref.shape[-1]
    x = x_ref[...]
    y = jnp.dot(x.astype(wt_ref.dtype), wt_ref[...],
                preferred_element_type=jnp.float32)                 # MXU, f32 accumulate
    if tn == x_ref.shape[-1]:
        x_res = x                                                    # single N tile
    else:
        col0 = pl.multiple_of(pl.program_id(1) * tn, 128)
        x_res = x_ref[:, pl.ds(col0, tn)]                            # residual columns
    o_ref[...] = (x_res + y + b_ref[...]).astype(o_ref.dtype)        # fused VPU epilogue


def prepare_residual_linear_params(w, b, *, compute_dtype=jnp.bfloat16):
    """Transpose/pad/cast the nn.Linear params once (hoist out of the per-call path).

    w: (hidden, hidden) in nn.Linear (out, in) layout; b: (hidden,).
    Returns (wt, b2d): wt = padded W.T in compute_dtype (Hp, Hp); b2d = (1, Hp) f32.
    NOTE precision contract: compute_dtype=bf16 quantizes the weight; the matmul
    accumulation and the residual add stay f32.
    """
    hidden = w.shape[0]
    hp = _round_up(hidden, 128)
    wt = w.T                                      # (in, out): kernel computes x @ wt
    if hp != hidden:
        wt = jnp.pad(wt, ((0, hp - hidden), (0, hp - hidden)))
        b = jnp.pad(b, (0, hp - hidden))
    return wt.astype(compute_dtype), b.reshape(1, hp).astype(jnp.float32)


def residual_linear(x, w=None, b=None, *, compute_dtype=jnp.bfloat16,
                    out_dtype=None, prepared=None):
    """x: (batch, seq, hidden). Pass raw nn.Linear (w, b) or `prepared` from
    prepare_residual_linear_params (preferred: hoists weight prep out of the call)."""
    batch, seq, hidden = x.shape
    rows = batch * seq
    hp = _round_up(hidden, 128)
    out_dtype = x.dtype if out_dtype is None else jnp.dtype(out_dtype)

    if prepared is None:
        prepared = prepare_residual_linear_params(w, b, compute_dtype=compute_dtype)
    wt, b2d = prepared
    compute_dtype = wt.dtype
    assert wt.shape == (hp, hp) and b2d.shape == (1, hp)

    x2d = x.reshape(rows, hidden)
    if hp != hidden:
        # K/contraction axis must be explicitly zero-padded (and lane-dense).
        x2d = jnp.pad(x2d, ((0, 0), (0, hp - hidden)))
    # Rows are intentionally NOT padded: the grid uses cdiv + Pallas masking.

    vmem_cap = _vmem_capacity_bytes()
    budget = int(vmem_cap * 0.7)
    w_itemsize = jnp.dtype(compute_dtype).itemsize
    x_itemsize = x2d.dtype.itemsize
    out_itemsize = jnp.dtype(out_dtype).itemsize

    def _call(tm, tn, single_buffer_resident):
        n_row = pl.cdiv(rows, tm)
        n_col = hp // tn
        if tn == hp:
            # Constant index_map -> DMA'd once; single-buffer it when possible.
            kw = dict(pipeline_mode=pl.Buffered(1)) if single_buffer_resident else {}
            wt_spec = pl.BlockSpec((hp, tn), lambda i, j: (0, 0), **kw)
            b_spec = pl.BlockSpec((1, tn), lambda i, j: (0, 0), **kw)
        else:
            wt_spec = pl.BlockSpec((hp, tn), lambda i, j: (0, j))
            b_spec = pl.BlockSpec((1, tn), lambda i, j: (0, j))

        w_bytes = hp * hp * w_itemsize
        cost = pl.CostEstimate(
            flops=2 * rows * hp * hp,
            transcendentals=0,
            bytes_accessed=(rows * hp * x_itemsize                 # x read (once per row tile)
                            + rows * hp * out_itemsize             # out write
                            + w_bytes * (1 if tn == hp else n_row)  # W.T (re)reads
                            + hp * 4),                             # bias
        )

        return pl.pallas_call(
            _residual_linear_kernel,
            out_shape=jax.ShapeDtypeStruct((rows, hp), out_dtype),
            grid_spec=pltpu.PrefetchScalarGridSpec(
                num_scalar_prefetch=0,
                grid=(n_row, n_col),
                in_specs=[
                    pl.BlockSpec((tm, hp), lambda i, j: (i, 0)),   # x slab, resident over j
                    wt_spec,
                    b_spec,
                ],
                out_specs=pl.BlockSpec((tm, tn), lambda i, j: (i, j)),  # lane-dense stores
            ),
            compiler_params=pltpu.CompilerParams(
                dimension_semantics=("parallel", "arbitrary"),     # rows over TCs, N sequential
                vmem_limit_bytes=int(vmem_cap * 0.85),
            ),
            cost_estimate=cost,
        )(x2d, wt, b2d)

    tm, tn = _choose_tiles(rows, hp, w_itemsize=w_itemsize, x_itemsize=x_itemsize,
                           out_itemsize=out_itemsize, budget=budget,
                           single_buffer_resident=True)
    try:
        out2d = _call(tm, tn, single_buffer_resident=True)
    except Exception:
        # pl.Buffered(1) unavailable on this jax version (or accounting too tight):
        # fall back to default double-buffering and re-derive tiles against it.
        tm, tn = _choose_tiles(rows, hp, w_itemsize=w_itemsize, x_itemsize=x_itemsize,
                               out_itemsize=out_itemsize, budget=budget,
                               single_buffer_resident=False)
        out2d = _call(tm, tn, single_buffer_resident=False)

    if hp != hidden:
        out2d = out2d[:, :hidden]
    return out2d.reshape(batch, seq, hidden)


if __name__ == "__main__":
    key = jax.random.PRNGKey(0)
    kx, kw, kb = jax.random.split(key, 3)

    batch, seq, hidden = 2, 8, 32
    x = jax.random.normal(kx, (batch, seq, hidden), dtype=jnp.float32)
    # nn.Linear(hidden, hidden): weight (out, in), bias (out,)
    w = jax.random.normal(kw, (hidden, hidden), dtype=jnp.float32) * 0.05
    b = jax.random.normal(kb, (hidden,), dtype=jnp.float32) * 0.05

    # Reference: Residual(nn.Linear) forward = x + (x @ W.T + b)
    ref = x + (jnp.einsum("bsh,oh->bso", x, w) + b)

    # f32 MXU path: tight tolerance (validates tiling / masking / residual math).
    out_f32 = residual_linear(x, w, b, compute_dtype=jnp.float32)
    jax.block_until_ready(out_f32)
    assert out_f32.shape == ref.shape
    assert jnp.allclose(out_f32, ref, atol=1e-4, rtol=1e-4)

    # Production path: bf16 weight on the MXU, f32 accumulation + f32 residual,
    # with the weight prep hoisted out of the call (as a real model would).
    params = prepare_residual_linear_params(w, b, compute_dtype=jnp.bfloat16)
    out_bf16 = residual_linear(x, prepared=params)
    jax.block_until_ready(out_bf16)
    assert out_bf16.shape == ref.shape
    assert jnp.allclose(out_bf16, ref, atol=2e-2, rtol=2e-2)

    print("KERNEL_OK")
</pallas_src>

<mosaic_0001>
module attributes {stable_mosaic.version = 11 : i64} {
  func.func @_residual_linear_kernel(%arg0: i32, %arg1: i32, %arg2: memref<16x128xf32, #tpu.memory_space<vmem>>, %arg3: memref<128x128xf32, #tpu.memory_space<vmem>>, %arg4: memref<1x128xf32, #tpu.memory_space<vmem>>, %arg5: memref<16x128xf32, #tpu.memory_space<vmem>>) attributes {dimension_semantics = [#tpu.dimension_semantics<parallel>, #tpu.dimension_semantics<arbitrary>], iteration_bounds = array<i64: 1, 1>, scalar_prefetch = 0 : i64, scratch_operands = 0 : i64, tpu.core_type = #tpu.core_type<tc>, window_params = [{transform_indices = @transform_0, window_bounds = array<i64: 16, 128>}, {pipeline_mode = #tpu.pipeline_mode<synchronous>, transform_indices = @transform_1, window_bounds = array<i64: 128, 128>}, {pipeline_mode = #tpu.pipeline_mode<synchronous>, transform_indices = @transform_2, window_bounds = array<i64: 1, 128>}, {transform_indices = @transform_3, window_bounds = array<i64: 16, 128>}]} {
    %c0 = arith.constant 0 : index
    %c0_0 = arith.constant 0 : index
    %0 = vector.load %arg2[%c0, %c0_0] : memref<16x128xf32, #tpu.memory_space<vmem>>, vector<16x128xf32>
    %c0_1 = arith.constant 0 : index
    %c0_2 = arith.constant 0 : index
    %1 = vector.load %arg3[%c0_1, %c0_2] : memref<128x128xf32, #tpu.memory_space<vmem>>, vector<128x128xf32>
    %cst = arith.constant dense<0.000000e+00> : vector<16x128xf32>
    %2 = tpu.matmul %0, %1, %cst {dimension_numbers = #tpu.dot_dimension_numbers<[1], [0], [0], [1], [0, 0, 1, 1], [], []>} : vector<16x128xf32>, vector<128x128xf32>, vector<16x128xf32> -> vector<16x128xf32>
    %3 = arith.addf %0, %2 : vector<16x128xf32>
    %c0_3 = arith.constant 0 : index
    %c0_4 = arith.constant 0 : index
    %4 = vector.load %arg4[%c0_3, %c0_4] : memref<1x128xf32, #tpu.memory_space<vmem>>, vector<1x128xf32>
    %5 = vector.broadcast %4 : vector<1x128xf32> to vector<16x128xf32>
    %6 = arith.addf %3, %5 : vector<16x128xf32>
    %c0_5 = arith.constant 0 : index
    %c0_6 = arith.constant 0 : index
    %7 = vector.load %arg5[%c0_5, %c0_6] : memref<16x128xf32, #tpu.memory_space<vmem>>, vector<16x128xf32>
    tpu.vector_store %arg5[%c0_5, %c0_6], %6 {strides = array<i32>} : memref<16x128xf32, #tpu.memory_space<vmem>>, vector<16x128xf32>,
    return
  }
  func.func @transform_0(%arg0: i32, %arg1: i32) -> (i32, i32) {
    %c0_i32 = arith.constant 0 : i32
    %c0_i32_0 = arith.constant 0 : i32
    return %arg0, %c0_i32 : i32, i32
  }
  func.func @transform_1(%arg0: i32, %arg1: i32) -> (i32, i32) {
    %c0_i32 = arith.constant 0 : i32
    %c0_i32_0 = arith.constant 0 : i32
    %c0_i32_1 = arith.constant 0 : i32
    return %c0_i32, %c0_i32_0 : i32, i32
  }
  func.func @transform_2(%arg0: i32, %arg1: i32) -> (i32, i32) {
    %c0_i32 = arith.constant 0 : i32
    %c0_i32_0 = arith.constant 0 : i32
    %c0_i32_1 = arith.constant 0 : i32
    return %c0_i32, %c0_i32_0 : i32, i32
  }
  func.func @transform_3(%arg0: i32, %arg1: i32) -> (i32, i32) {
    %c0_i32 = arith.constant 0 : i32
    return %arg0, %arg1 : i32, i32
  }
}

module attributes {stable_mosaic.version = 11 : i64} {
  func.func @_residual_linear_kernel(%arg0: i32, %arg1: i32, %arg2: memref<16x128xf32, #tpu.memory_space<vmem>>, %arg3: memref<128x128xf32, #tpu.memory_space<vmem>>, %arg4: memref<1x128xf32, #tpu.memory_space<vmem>>, %arg5: memref<16x128xf32, #tpu.memory_space<vmem>>) attributes {dimension_semantics = [#tpu.dimension_semantics<parallel>, #tpu.dimension_semantics<arbitrary>], iteration_bounds = array<i64: 1, 1>, scalar_prefetch = 0 : i64, scratch_operands = 0 : i64, tpu.core_type = #tpu.core_type<tc>, window_params = [{transform_indices = @transform_0, window_bounds = array<i64: 16, 128>}, {pipeline_mode = #tpu.pipeline_mode<synchronous>, transform_indices = @transform_1, window_bounds = array<i64: 128, 128>}, {pipeline_mode = #tpu.pipeline_mode<synchronous>, transform_indices = @transform_2, window_bounds = array<i64: 1, 128>}, {transform_indices = @transform_3, window_bounds = array<i64: 16, 128>}]} {
    %c0 = arith.constant 0 : index
    %c0_0 = arith.constant 0 : index
    %0 = vector.load %arg2[%c0, %c0_0] : memref<16x128xf32, #tpu.memory_space<vmem>>, vector<16x128xf32>
    %c0_1 = arith.constant 0 : index
    %c0_2 = arith.constant 0 : index
    %1 = vector.load %arg3[%c0_1, %c0_2] : memref<128x128xf32, #tpu.memory_space<vmem>>, vector<128x128xf32>
    %cst = arith.constant dense<0.000000e+00> : vector<16x128xf32>
    %2 = tpu.matmul %0, %1, %cst {dimension_numbers = #tpu.dot_dimension_numbers<[1], [0], [0], [1], [0, 0, 1, 1], [], []>} : vector<16x128xf32>, vector<128x128xf32>, vector<16x128xf32> -> vector<16x128xf32>
    %3 = arith.addf %0, %2 : vector<16x128xf32>
    %c0_3 = arith.constant 0 : index
    %c0_4 = arith.constant 0 : index
    %4 = vector.load %arg4[%c0_3, %c0_4] : memref<1x128xf32, #tpu.memory_space<vmem>>, vector<1x128xf32>
    %5 = vector.broadcast %4 : vector<1x128xf32> to vector<16x128xf32>
    %6 = arith.addf %3, %5 : vector<16x128xf32>
    %c0_5 = arith.constant 0 : index
    %c0_6 = arith.constant 0 : index
    %7 = vector.load %arg5[%c0_5, %c0_6] : memref<16x128xf32, #tpu.memory_space<vmem>>, vector<16x128xf32>
    tpu.vector_store %arg5[%c0_5, %c0_6], %6 {strides = array<i32>} : memref<16x128xf32, #tpu.memory_space<vmem>>, vector<16x128xf32>,
    return
  }
  func.func @transform_0(%arg0: i32, %arg1: i32) -> (i32, i32) {
    %c0_i32 = arith.constant 0 : i32
    %c0_i32_0 = arith.constant 0 : i32
    return %arg0, %c0_i32 : i32, i32
  }
  func.func @transform_1(%arg0: i32, %arg1: i32) -> (i32, i32) {
    %c0_i32 = arith.constant 0 : i32
    %c0_i32_0 = arith.constant 0 : i32
    %c0_i32_1 = arith.constant 0 : i32
    return %c0_i32, %c0_i32_0 : i32, i32
  }
  func.func @transform_2(%arg0: i32, %arg1: i32) -> (i32, i32) {
    %c0_i32 = arith.constant 0 : i32
    %c0_i32_0 = arith.constant 0 : i32
    %c0_i32_1 = arith.constant 0 : i32
    return %c0_i32, %c0_i32_0 : i32, i32
  }
  func.func @transform_3(%arg0: i32, %arg1: i32) -> (i32, i32) {
    %c0_i32 = arith.constant 0 : i32
    return %arg0, %arg1 : i32, i32
  }
}

</mosaic_0001>

<llo_original>
// kernel: tpu_custom_call.1
$region0: #{tpu_custom_call.1}
  #allocation0 [shape = 'u32[]', space=smem, size = 0x4, offset = 0x4, fixed_abs, tag = 'smem constant byte address 0x4 - core index']
  #allocation1 [shape = 'u32[72,128]{1,0:T(1,128)}', space=vmem, size = 0x9000, scoped, tag = 'internal scratch']
  %s0 = inlined_call_operand.hbm [shape: f32[16,128], index: 0, kind: input, shape index: {}]
  %s1 = inlined_call_operand.hbm [shape: f32[128,128], index: 1, kind: input, shape index: {}]
  %s2 = inlined_call_operand.vmem [shape: f32[1,128], index: 2, kind: input, shape index: {}]
  %s3 = inlined_call_operand.hbm [shape: f32[16,128], index: 3, kind: output, shape index: {}]
  %s4 = sld [smem:[#allocation0]]
  $region30: #{tpu_custom_call.1} parent=0
    _
  %s6 = ssub.s32 1, %s4
  %s7 = scalar_select 0, %s6, %s4
  $region1: #{tpu_custom_call.1} parent=0
    #allocation2 [shape = 'u8[8192]{0}', space=vmem, size = 0x2000, scoped, tag = 'input window, operand 0, single buffered']
    #allocation3 [shape = 's32[1]{0}', space=sflag, size = 0x4, scoped, tag = 'scoped memory for tpu_custom_call.1']
    #allocation4 [shape = 's32[1]{0}', space=sflag, size = 0x4, scoped, tag = 'scoped memory for tpu_custom_call.1']
    #allocation5 [shape = 'u8[65536]{0}', space=vmem, size = 0x10000, scoped, tag = 'input window, operand 1, single buffered']
    #allocation6 [shape = 's32[1]{0}', space=sflag, size = 0x4, scoped, tag = 'scoped memory for tpu_custom_call.1']
    #allocation7 [shape = 'u8[8192]{0}', space=vmem, size = 0x2000, scoped, tag = 'output window, operand 0, single buffered']
    %8 = vsyncpa [#allocation3], 0
    %9 = vsyncpa [#allocation6], 0
    %10 = vsyncpa [#allocation4], 0
    // Predicated region
    $region2: #{tpu_custom_call.1} parent=1 // pred_check
      _
    $region3: #{tpu_custom_call.1} parent=1 // pred_check_branch
      %12 = sbr.rel (0) target = $region5
    $region4: #{tpu_custom_call.1} parent=1 // pred_region
      %14 = vsyncadd [#allocation3], 0
      %s15 = sshll.u32 %s0, 4
      %s16 = int_to_ptr.hbm [resolvable:$true] %s15
      %s17 = sshll.u32 [#allocation2], 4
      %s18 = int_to_ptr.vmem [resolvable:$true] %s17
      %23 = dma.hbm_to_vmem [thread:$0]  %s16, 256, %s18, [#allocation3], 128, 128, 8
    $region5: #{tpu_custom_call.1} parent=1 // pred_fallthru
      _
    // Predicated region
    $region6: #{tpu_custom_call.1} parent=1 // pred_check
      _
    $region7: #{tpu_custom_call.1} parent=1 // pred_check_branch
      %25 = sbr.rel (0) target = $region9
    $region8: #{tpu_custom_call.1} parent=1 // pred_region
      %27 = vsyncadd [#allocation6], 0
      %s28 = sshll.u32 %s1, 4
      %s29 = int_to_ptr.hbm [resolvable:$true] %s28
      %s30 = sshll.u32 [#allocation5], 4
      %s31 = int_to_ptr.vmem [resolvable:$true] %s30
      %36 = dma.hbm_to_vmem [thread:$0]  %s29, 2048, %s31, [#allocation6], 128, 128, 8
    $region9: #{tpu_custom_call.1} parent=1 // pred_fallthru
      _
    // Predicated region
    $region10: #{tpu_custom_call.1} parent=1 // pred_check
      _
    $region11: #{tpu_custom_call.1} parent=1 // pred_check_branch
      %38 = sbr.rel (0) target = $region13
    $region12: #{tpu_custom_call.1} parent=1 // pred_region
      _
    $region13: #{tpu_custom_call.1} parent=1 // pred_fallthru
      _
    // Predicated region
    $region14: #{tpu_custom_call.1} parent=1 // pred_check
      _
    $region15: #{tpu_custom_call.1} parent=1 // pred_check_branch
      %40 = sbr.rel (0) target = $region17
    $region16: #{tpu_custom_call.1} parent=1 // pred_region
      %42 = dma.done [#allocation3], 256
    $region17: #{tpu_custom_call.1} parent=1 // pred_fallthru
      _
    // Predicated region
    $region18: #{tpu_custom_call.1} parent=1 // pred_check
      _
    $region19: #{tpu_custom_call.1} parent=1 // pred_check_branch
      %44 = sbr.rel (0) target = $region21
    $region20: #{tpu_custom_call.1} parent=1 // pred_region
      %46 = dma.done [#allocation6], 2048
    $region21: #{tpu_custom_call.1} parent=1 // pred_fallthru
      _
    %v47 = vld [vmem:[#allocation2] sm:$0xff]
    %v48 = vld [vmem:[#allocation2 + $0x8] sm:$0xff]
    %v49 = vld [vmem:[#allocation5] sm:$0xff]
    %v50 = vld [vmem:[#allocation5 + $0x8] sm:$0xff]
    %v51 = vld [vmem:[#allocation5 + $0x10] sm:$0xff]
    %v52 = vld [vmem:[#allocation5 + $0x18] sm:$0xff]
    %v53 = vld [vmem:[#allocation5 + $0x20] sm:$0xff]
    %v54 = vld [vmem:[#allocation5 + $0x28] sm:$0xff]
    %v55 = vld [vmem:[#allocation5 + $0x30] sm:$0xff]
    %v56 = vld [vmem:[#allocation5 + $0x38] sm:$0xff]
    %v57 = vld [vmem:[#allocation5 + $0x40] sm:$0xff]
    %v58 = vld [vmem:[#allocation5 + $0x48] sm:$0xff]
    %v59 = vld [vmem:[#allocation5 + $0x50] sm:$0xff]
    %v60 = vld [vmem:[#allocation5 + $0x58] sm:$0xff]
    %v61 = vld [vmem:[#allocation5 + $0x60] sm:$0xff]
    %v62 = vld [vmem:[#allocation5 + $0x68] sm:$0xff]
    %v63 = vld [vmem:[#allocation5 + $0x70] sm:$0xff]
    %v64 = vld [vmem:[#allocation5 + $0x78] sm:$0xff]
    %65 = vmatpush.msra.mxu0 %v64
    %66 = vmatpush.msra.mxu0 %v63
    %67 = vmatpush.msra.mxu0 %v62
    %68 = vmatpush.msra.mxu0 %v61
    %69 = vmatpush.msra.mxu0 %v60
    %70 = vmatpush.msra.mxu0 %v59
    %71 = vmatpush.msra.mxu0 %v58
    %72 = vmatpush.msra.mxu0 %v57
    %73 = vmatpush.msra.mxu0 %v56
    %74 = vmatpush.msra.mxu0 %v55
    %75 = vmatpush.msra.mxu0 %v54
    %76 = vmatpush.msra.mxu0 %v53
    %77 = vmatpush.msra.mxu0 %v52
    %78 = vmatpush.msra.mxu0 %v51
    %79 = vmatpush.msra.mxu0 %v50
    %80 = vmatpush.msra.mxu0 %v49
    %81 = vmatmul.f32.gmra.mxu0 %v47
    %v82 = vpop.f32.mrf.mxu0
    %v83 = vadd.f32 0.0, %v82
    %84 = vmatmul.f32.gmra.mxu0 %v48
    %v85 = vpop.f32.mrf.mxu0
    %v86 = vadd.f32 0.0, %v85
    %87 = vdwg.mxu0
    %v88 = vadd.f32 %v47, %v83
    %v89 = vadd.f32 %v48, %v86
    %v90 = vld [vmem:[%s2] sm:$0x1]
    %v92 = vperm.slane %v90, 0
    %v94 = vadd.f32 %v88, %v92
    %v95 = vadd.f32 %v89, %v92
    %96 = vst [vmem:[#allocation7] sm:$0xff] %v94
    %97 = vst [vmem:[#allocation7 + $0x8] sm:$0xff] %v95
    // Predicated region
    $region22: #{tpu_custom_call.1} parent=1 // pred_check
      _
    $region23: #{tpu_custom_call.1} parent=1 // pred_check_branch
      %99 = sbr.rel (0) target = $region25
    $region24: #{tpu_custom_call.1} parent=1 // pred_region
      %101 = vsyncadd [#allocation4], 0
      %s102 = sshll.u32 [#allocation7], 4
      %s103 = int_to_ptr.vmem [resolvable:$true] %s102
      %s104 = sshll.u32 %s3, 4
      %s105 = int_to_ptr.hbm [resolvable:$true] %s104
      %110 = dma.vmem_to_hbm [thread:$0]  %s103, 256, %s105, [#allocation4], 128, 128, 8
    $region25: #{tpu_custom_call.1} parent=1 // pred_fallthru
      _
    // Predicated region
    $region26: #{tpu_custom_call.1} parent=1 // pred_check
      _
    $region27: #{tpu_custom_call.1} parent=1 // pred_check_branch
      %112 = sbr.rel (0) target = $region29
    $region28: #{tpu_custom_call.1} parent=1 // pred_region
      %114 = dma.done [#allocation4], 256
    $region29: #{tpu_custom_call.1} parent=1 // pred_fallthru
      _
    %115 = vsyncpa [#allocation3], 1
    %116 = vsyncpa [#allocation6], 1
    %117 = vsyncpa [#allocation4], 1

// kernel: tpu_custom_call.1
$region0: #{tpu_custom_call.1}
  #allocation0 [shape = 'u32[]', space=smem, size = 0x4, offset = 0x4, fixed_abs, tag = 'smem constant byte address 0x4 - core index']
  #allocation1 [shape = 'u32[72,128]{1,0:T(1,128)}', space=vmem, size = 0x9000, scoped, tag = 'internal scratch']
  %s0 = inlined_call_operand.hbm [shape: f32[16,128], index: 0, kind: input, shape index: {}]
  %s1 = inlined_call_operand.hbm [shape: f32[128,128], index: 1, kind: input, shape index: {}]
  %s2 = inlined_call_operand.vmem [shape: f32[1,128], index: 2, kind: input, shape index: {}]
  %s3 = inlined_call_operand.hbm [shape: f32[16,128], index: 3, kind: output, shape index: {}]
  %s4 = sld [smem:[#allocation0]]
  $region30: #{tpu_custom_call.1} parent=0
    _
  %s6 = ssub.s32 1, %s4
  %s7 = scalar_select 0, %s6, %s4
  $region1: #{tpu_custom_call.1} parent=0
    #allocation2 [shape = 'u8[8192]{0}', space=vmem, size = 0x2000, scoped, tag = 'input window, operand 0, single buffered']
    #allocation3 [shape = 's32[1]{0}', space=sflag, size = 0x4, scoped, tag = 'scoped memory for tpu_custom_call.1']
    #allocation4 [shape = 's32[1]{0}', space=sflag, size = 0x4, scoped, tag = 'scoped memory for tpu_custom_call.1']
    #allocation5 [shape = 'u8[65536]{0}', space=vmem, size = 0x10000, scoped, tag = 'input window, operand 1, single buffered']
    #allocation6 [shape = 's32[1]{0}', space=sflag, size = 0x4, scoped, tag = 'scoped memory for tpu_custom_call.1']
    #allocation7 [shape = 'u8[8192]{0}', space=vmem, size = 0x2000, scoped, tag = 'output window, operand 0, single buffered']
    %8 = vsyncpa [#allocation3], 0
    %9 = vsyncpa [#allocation6], 0
    %10 = vsyncpa [#allocation4], 0
    // Predicated region
    $region2: #{tpu_custom_call.1} parent=1 // pred_check
      _
    $region3: #{tpu_custom_call.1} parent=1 // pred_check_branch
      %12 = sbr.rel (0) target = $region5
    $region4: #{tpu_custom_call.1} parent=1 // pred_region
      %14 = vsyncadd [#allocation3], 0
      %s15 = sshll.u32 %s0, 4
      %s16 = int_to_ptr.hbm [resolvable:$true] %s15
      %s17 = sshll.u32 [#allocation2], 4
      %s18 = int_to_ptr.vmem [resolvable:$true] %s17
      %23 = dma.hbm_to_vmem [thread:$0]  %s16, 256, %s18, [#allocation3], 128, 128, 8
    $region5: #{tpu_custom_call.1} parent=1 // pred_fallthru
      _
    // Predicated region
    $region6: #{tpu_custom_call.1} parent=1 // pred_check
      _
    $region7: #{tpu_custom_call.1} parent=1 // pred_check_branch
      %25 = sbr.rel (0) target = $region9
    $region8: #{tpu_custom_call.1} parent=1 // pred_region
      %27 = vsyncadd [#allocation6], 0
      %s28 = sshll.u32 %s1, 4
      %s29 = int_to_ptr.hbm [resolvable:$true] %s28
      %s30 = sshll.u32 [#allocation5], 4
      %s31 = int_to_ptr.vmem [resolvable:$true] %s30
      %36 = dma.hbm_to_vmem [thread:$0]  %s29, 2048, %s31, [#allocation6], 128, 128, 8
    $region9: #{tpu_custom_call.1} parent=1 // pred_fallthru
      _
    // Predicated region
    $region10: #{tpu_custom_call.1} parent=1 // pred_check
      _
    $region11: #{tpu_custom_call.1} parent=1 // pred_check_branch
      %38 = sbr.rel (0) target = $region13
    $region12: #{tpu_custom_call.1} parent=1 // pred_region
      _
    $region13: #{tpu_custom_call.1} parent=1 // pred_fallthru
      _
    // Predicated region
    $region14: #{tpu_custom_call.1} parent=1 // pred_check
      _
    $region15: #{tpu_custom_call.1} parent=1 // pred_check_branch
      %40 = sbr.rel (0) target = $region17
    $region16: #{tpu_custom_call.1} parent=1 // pred_region
      %42 = dma.done [#allocation3], 256
    $region17: #{tpu_custom_call.1} parent=1 // pred_fallthru
      _
    // Predicated region
    $region18: #{tpu_custom_call.1} parent=1 // pred_check
      _
    $region19: #{tpu_custom_call.1} parent=1 // pred_check_branch
      %44 = sbr.rel (0) target = $region21
    $region20: #{tpu_custom_call.1} parent=1 // pred_region
      %46 = dma.done [#allocation6], 2048
    $region21: #{tpu_custom_call.1} parent=1 // pred_fallthru
      _
    %v47 = vld [vmem:[#allocation2] sm:$0xff]
    %v48 = vld [vmem:[#allocation2 + $0x8] sm:$0xff]
    %v49 = vld [vmem:[#allocation5] sm:$0xff]
    %v50 = vld [vmem:[#allocation5 + $0x8] sm:$0xff]
    %v51 = vld [vmem:[#allocation5 + $0x10] sm:$0xff]
    %v52 = vld [vmem:[#allocation5 + $0x18] sm:$0xff]
    %v53 = vld [vmem:[#allocation5 + $0x20] sm:$0xff]
    %v54 = vld [vmem:[#allocation5 + $0x28] sm:$0xff]
    %v55 = vld [vmem:[#allocation5 + $0x30] sm:$0xff]
    %v56 = vld [vmem:[#allocation5 + $0x38] sm:$0xff]
    %v57 = vld [vmem:[#allocation5 + $0x40] sm:$0xff]
    %v58 = vld [vmem:[#allocation5 + $0x48] sm:$0xff]
    %v59 = vld [vmem:[#allocation5 + $0x50] sm:$0xff]
    %v60 = vld [vmem:[#allocation5 + $0x58] sm:$0xff]
    %v61 = vld [vmem:[#allocation5 + $0x60] sm:$0xff]
    %v62 = vld [vmem:[#allocation5 + $0x68] sm:$0xff]
    %v63 = vld [vmem:[#allocation5 + $0x70] sm:$0xff]
    %v64 = vld [vmem:[#allocation5 + $0x78] sm:$0xff]
    %65 = vmatpush.msra.mxu0 %v64
    %66 = vmatpush.msra.mxu0 %v63
    %67 = vmatpush.msra.mxu0 %v62
    %68 = vmatpush.msra.mxu0 %v61
    %69 = vmatpush.msra.mxu0 %v60
    %70 = vmatpush.msra.mxu0 %v59
    %71 = vmatpush.msra.mxu0 %v58
    %72 = vmatpush.msra.mxu0 %v57
    %73 = vmatpush.msra.mxu0 %v56
    %74 = vmatpush.msra.mxu0 %v55
    %75 = vmatpush.msra.mxu0 %v54
    %76 = vmatpush.msra.mxu0 %v53
    %77 = vmatpush.msra.mxu0 %v52
    %78 = vmatpush.msra.mxu0 %v51
    %79 = vmatpush.msra.mxu0 %v50
    %80 = vmatpush.msra.mxu0 %v49
    %81 = vmatmul.f32.gmra.mxu0 %v47
    %v82 = vpop.f32.mrf.mxu0
    %v83 = vadd.f32 0.0, %v82
    %84 = vmatmul.f32.gmra.mxu0 %v48
    %v85 = vpop.f32.mrf.mxu0
    %v86 = vadd.f32 0.0, %v85
    %87 = vdwg.mxu0
    %v88 = vadd.f32 %v47, %v83
    %v89 = vadd.f32 %v48, %v86
    %v90 = vld [vmem:[%s2] sm:$0x1]
    %v92 = vperm.slane %v90, 0
    %v94 = vadd.f32 %v88, %v92
    %v95 = vadd.f32 %v89, %v92
    %96 = vst [vmem:[#allocation7] sm:$0xff] %v94
    %97 = vst [vmem:[#allocation7 + $0x8] sm:$0xff] %v95
    // Predicated region
    $region22: #{tpu_custom_call.1} parent=1 // pred_check
      _
    $region23: #{tpu_custom_call.1} parent=1 // pred_check_branch
      %99 = sbr.rel (0) target = $region25
    $region24: #{tpu_custom_call.1} parent=1 // pred_region
      %101 = vsyncadd [#allocation4], 0
      %s102 = sshll.u32 [#allocation7], 4
      %s103 = int_to_ptr.vmem [resolvable:$true] %s102
      %s104 = sshll.u32 %s3, 4
      %s105 = int_to_ptr.hbm [resolvable:$true] %s104
      %110 = dma.vmem_to_hbm [thread:$0]  %s103, 256, %s105, [#allocation4], 128, 128, 8
    $region25: #{tpu_custom_call.1} parent=1 // pred_fallthru
      _
    // Predicated region
    $region26: #{tpu_custom_call.1} parent=1 // pred_check
      _
    $region27: #{tpu_custom_call.1} parent=1 // pred_check_branch
      %112 = sbr.rel (0) target = $region29
    $region28: #{tpu_custom_call.1} parent=1 // pred_region
      %114 = dma.done [#allocation4], 256
    $region29: #{tpu_custom_call.1} parent=1 // pred_fallthru
      _
    %115 = vsyncpa [#allocation3], 1
    %116 = vsyncpa [#allocation6], 1
    %117 = vsyncpa [#allocation4], 1

</llo_original>
